<compile_context>
chip_gen: v7x
topology: tpu7x:2x2x1
jax: 0.10.0
libtpu: 0.0.40
codegen_flags: <defaults>
</compile_context>

<pallas_src>
import jax
import jax.numpy as jnp
from jax.experimental import pallas as pl
from jax.experimental.pallas import tpu as pltpu  # noqa: F401  (TPU backend)

BN_EPS = 1e-5
LANE = 128
SUBLANE = 8


def _round_up(n, m):
    return ((n + m - 1) // m) * m


def _bn_relu_fused(h, gamma, beta):
    """Training-mode BatchNorm1d (biased var, two-pass stats) + ReLU, fused
    into one scale/shift:  y = relu(h*s + t),  s = gamma*rsqrt(var+eps),
    t = beta - mean*s.  Padded lanes have gamma=beta=0 -> stay exactly 0."""
    inv_b = 1.0 / h.shape[0]
    mean = jnp.sum(h, axis=0, keepdims=True) * inv_b            # XLU reduce
    centered = h - mean
    var = jnp.sum(centered * centered, axis=0, keepdims=True) * inv_b
    s = gamma * jax.lax.rsqrt(var + BN_EPS)                     # EUP rsqrt (free slot)
    t = beta - mean * s
    return jnp.maximum(h * s + t, 0.0)                          # 2 VPU ops/elt + relu


def _make_kernel(d_in, w_pad):
    """Kernel specialized (via closure) to the static row offsets of the
    packed weight slab:  [0:d_in] w1, [r2:r2+w_pad] w2, [r3:r3+w_pad] w3."""
    r2 = _round_up(d_in, SUBLANE)   # sublane-aligned start of w2
    r3 = r2 + w_pad

    def kernel(x_ref, w_ref, p_ref, o_ref):
        x = x_ref[...]

        # TODO(synk): at non-toy sizes cast x/weights to bf16 for the matmuls
        # (keep BN stats in f32) and tile the batch with a "parallel" grid axis
        # + two-pass cross-tile BN reduction (v7x: 2 TCs, 64 MiB VMEM).
        # layer 1: Linear (bias folded away by BN) + fused BN/ReLU
        h1 = jnp.dot(x, w_ref[0:d_in, :], preferred_element_type=jnp.float32)
        h1 = _bn_relu_fused(h1, p_ref[0:1, :], p_ref[1:2, :])

        # layer 2: Linear (bias folded away by BN) + fused BN/ReLU
        h2 = jnp.dot(h1, w_ref[r2:r2 + w_pad, :], preferred_element_type=jnp.float32)
        h2 = _bn_relu_fused(h2, p_ref[2:3, :], p_ref[3:4, :])

        # layer 3: Linear (bias kept; output lane-padded -> unmasked vst)
        out = jnp.dot(h2, w_ref[r3:r3 + w_pad, :],
                      preferred_element_type=jnp.float32) + p_ref[4:5, :]
        o_ref[...] = out.astype(o_ref.dtype)

    return kernel


def mlp_bn_forward(x, packed_params):
    """packed_params = (w_slab, p_slab) from pack_kernel_params.

    Returns the LANE-PADDED output (B, w_pad); true logits are out[:, :out_dim]
    (padded lanes are exactly zero)."""
    w_slab, p_slab = packed_params
    B, d_in = x.shape
    w_pad = w_slab.shape[1]

    # Single block, no grid: whole (tiny) batch + weights fit easily in VMEM
    # and full-batch residency gives exact PyTorch training-mode BN statistics.
    full = lambda shape: pl.BlockSpec(shape, lambda: (0,) * len(shape))

    return pl.pallas_call(
        _make_kernel(d_in, w_pad),
        out_shape=jax.ShapeDtypeStruct((B, w_pad), jnp.float32),
        in_specs=[full(x.shape), full(w_slab.shape), full(p_slab.shape)],
        out_specs=full((B, w_pad)),
    )(x, w_slab, p_slab)


def init_params(key, input_dim, hidden_1, hidden_2, output_dim):
    """Deterministic init mirroring PyTorch defaults (U(-1/sqrt(fan_in), .)).
    Returns the full PyTorch-equivalent parameter set (incl. b1/b2)."""
    ks = jax.random.split(key, 6)

    def linear(kw, kb, fan_in, fan_out):
        bound = 1.0 / jnp.sqrt(fan_in)
        # stored as (in, out) — transpose of PyTorch's (out, in)
        w = jax.random.uniform(kw, (fan_in, fan_out), jnp.float32, -bound, bound)
        b = jax.random.uniform(kb, (1, fan_out), jnp.float32, -bound, bound)
        return w, b

    w1, b1 = linear(ks[0], ks[1], input_dim, hidden_1)
    w2, b2 = linear(ks[2], ks[3], hidden_1, hidden_2)
    w3, b3 = linear(ks[4], ks[5], hidden_2, output_dim)

    g1 = jnp.ones((1, hidden_1), jnp.float32)
    be1 = jnp.zeros((1, hidden_1), jnp.float32)
    g2 = jnp.ones((1, hidden_2), jnp.float32)
    be2 = jnp.zeros((1, hidden_2), jnp.float32)
    return (w1, b1, g1, be1, w2, b2, g2, be2, w3, b3)


def pack_kernel_params(torch_params):
    """One-time param prep (runs once, NOT per forward call):
      * drop b1/b2 (cancelled by training-mode BN),
      * zero-pad all feature dims (hidden_1, hidden_2, output) to a common
        128-lane width (gamma/beta/b3 padded with zeros -> padded lanes stay 0),
      * stack w1|w2|w3 into one sublane-aligned (rows, w_pad) weight slab,
      * pack gamma1, beta1, gamma2, beta2, b3 into one (8, w_pad) slab.
    Returns (w_slab, p_slab)."""
    (w1, _b1, g1, be1, w2, _b2, g2, be2, w3, b3) = torch_params
    d_in, h1 = w1.shape
    h2 = w2.shape[1]
    out_dim = w3.shape[1]

    w_pad = _round_up(max(h1, h2, out_dim, 1), LANE)
    d_in_pad = _round_up(d_in, SUBLANE)

    # Weight slab: rows [0:d_in]=w1, [d_in_pad:+w_pad]=w2, [next:+w_pad]=w3.
    w1p = jnp.pad(w1, ((0, d_in_pad - d_in), (0, w_pad - h1)))
    w2p = jnp.pad(w2, ((0, w_pad - h1), (0, w_pad - h2)))
    w3p = jnp.pad(w3, ((0, w_pad - h2), (0, w_pad - out_dim)))
    w_slab = jnp.concatenate([w1p, w2p, w3p], axis=0)

    # Small-param slab (8, w_pad): gamma1, beta1, gamma2, beta2, b3, zeros.
    def row(v, n):
        return jnp.pad(v.reshape(1, -1), ((0, 0), (0, w_pad - n)))

    p_slab = jnp.concatenate(
        [row(g1, h1), row(be1, h1), row(g2, h2), row(be2, h2), row(b3, out_dim),
         jnp.zeros((SUBLANE - 5, w_pad), jnp.float32)], axis=0)

    return (w_slab, p_slab)


if __name__ == "__main__":
    input_dim, hidden_1, hidden_2, output_dim = 16, 32, 32, 2
    batch = 8

    key = jax.random.PRNGKey(0)
    kx, kp = jax.random.split(key)
    x = jax.random.normal(kx, (batch, input_dim), jnp.float32)

    torch_params = init_params(kp, input_dim, hidden_1, hidden_2, output_dim)
    packed = pack_kernel_params(torch_params)   # one-time prep

    out_padded = mlp_bn_forward(x, packed)      # (batch, 128), lane-dense
    jax.block_until_ready(out_padded)
    out = out_padded[:, :output_dim]            # consumer-side slice

    # Pure-JAX reference with FULL PyTorch semantics (incl. b1/b2) to verify
    # bias-cancellation + zero-padding optimizations are exact.
    def ref(x, p):
        (w1, b1, g1, be1, w2, b2, g2, be2, w3, b3) = p

        def bnrelu(h, g, b):
            m = h.mean(0, keepdims=True)
            v = ((h - m) ** 2).mean(0, keepdims=True)
            return jnp.maximum((h - m) / jnp.sqrt(v + BN_EPS) * g + b, 0.0)

        h1 = bnrelu(x @ w1 + b1, g1, be1)
        h2 = bnrelu(h1 @ w2 + b2, g2, be2)
        return h2 @ w3 + b3

    expected = ref(x, torch_params)
    assert out.shape == expected.shape
    assert jnp.allclose(out, expected, atol=1e-4, rtol=1e-4)
    # Padded lanes must be exactly zero (gamma/beta/b3 zero-padding invariant).
    assert jnp.all(out_padded[:, output_dim:] == 0.0)
    print("KERNEL_OK")
</pallas_src>

<mosaic_0001>
module attributes {stable_mosaic.version = 11 : i64} {
  func.func @kernel(%arg0: memref<8x16xf32, #tpu.memory_space<vmem>>, %arg1: memref<272x128xf32, #tpu.memory_space<vmem>>, %arg2: memref<8x128xf32, #tpu.memory_space<vmem>>, %arg3: memref<8x128xf32, #tpu.memory_space<vmem>>) attributes {dimension_semantics = [], scalar_prefetch = 0 : i64, scratch_operands = 0 : i64, tpu.core_type = #tpu.core_type<tc>} {
    %c0 = arith.constant 0 : index
    %c0_0 = arith.constant 0 : index
    %0 = vector.load %arg0[%c0, %c0_0] : memref<8x16xf32, #tpu.memory_space<vmem>>, vector<8x16xf32>
    %c0_1 = arith.constant 0 : index
    %c0_2 = arith.constant 0 : index
    %1 = vector.load %arg1[%c0_1, %c0_2] : memref<272x128xf32, #tpu.memory_space<vmem>>, vector<16x128xf32>
    %cst = arith.constant dense<0.000000e+00> : vector<8x128xf32>
    %2 = tpu.matmul %0, %1, %cst {dimension_numbers = #tpu.dot_dimension_numbers<[1], [0], [0], [1], [0, 0, 1, 1], [], []>} : vector<8x16xf32>, vector<16x128xf32>, vector<8x128xf32> -> vector<8x128xf32>
    %c0_3 = arith.constant 0 : index
    %c0_4 = arith.constant 0 : index
    %3 = vector.load %arg2[%c0_3, %c0_4] : memref<8x128xf32, #tpu.memory_space<vmem>>, vector<1x128xf32>
    %c1 = arith.constant 1 : index
    %c0_5 = arith.constant 0 : index
    %4 = vector.load %arg2[%c1, %c0_5] : memref<8x128xf32, #tpu.memory_space<vmem>>, vector<1x128xf32>
    %cst_6 = arith.constant dense<0.000000e+00> : vector<128xf32>
    %5 = vector.multi_reduction <add>, %2, %cst_6 [0] : vector<8x128xf32> to vector<128xf32>
    %6 = vector.shape_cast %5 : vector<128xf32> to vector<1x128xf32>
    %cst_7 = arith.constant 1.250000e-01 : f32
    %7 = vector.broadcast %cst_7 : f32 to vector<1x128xf32>
    %8 = arith.mulf %6, %7 : vector<1x128xf32>
    %9 = vector.broadcast %8 : vector<1x128xf32> to vector<8x128xf32>
    %10 = arith.subf %2, %9 : vector<8x128xf32>
    %11 = arith.mulf %10, %10 : vector<8x128xf32>
    %cst_8 = arith.constant dense<0.000000e+00> : vector<128xf32>
    %12 = vector.multi_reduction <add>, %11, %cst_8 [0] : vector<8x128xf32> to vector<128xf32>
    %13 = vector.shape_cast %12 : vector<128xf32> to vector<1x128xf32>
    %cst_9 = arith.constant 1.250000e-01 : f32
    %14 = vector.broadcast %cst_9 : f32 to vector<1x128xf32>
    %15 = arith.mulf %13, %14 : vector<1x128xf32>
    %cst_10 = arith.constant 9.99999974E-6 : f32
    %16 = vector.broadcast %cst_10 : f32 to vector<1x128xf32>
    %17 = arith.addf %15, %16 : vector<1x128xf32>
    %18 = math.rsqrt %17 : vector<1x128xf32>
    %19 = arith.mulf %3, %18 : vector<1x128xf32>
    %20 = arith.mulf %8, %19 : vector<1x128xf32>
    %21 = arith.subf %4, %20 : vector<1x128xf32>
    %22 = vector.broadcast %19 : vector<1x128xf32> to vector<8x128xf32>
    %23 = arith.mulf %2, %22 : vector<8x128xf32>
    %24 = vector.broadcast %21 : vector<1x128xf32> to vector<8x128xf32>
    %25 = arith.addf %23, %24 : vector<8x128xf32>
    %cst_11 = arith.constant 0.000000e+00 : f32
    %26 = vector.broadcast %cst_11 : f32 to vector<8x128xf32>
    %27 = arith.maximumf %25, %26 : vector<8x128xf32>
    %c16 = arith.constant 16 : index
    %c0_12 = arith.constant 0 : index
    %28 = vector.load %arg1[%c16, %c0_12] : memref<272x128xf32, #tpu.memory_space<vmem>>, vector<128x128xf32>
    %cst_13 = arith.constant dense<0.000000e+00> : vector<8x128xf32>
    %29 = tpu.matmul %27, %28, %cst_13 {dimension_numbers = #tpu.dot_dimension_numbers<[1], [0], [0], [1], [0, 0, 1, 1], [], []>} : vector<8x128xf32>, vector<128x128xf32>, vector<8x128xf32> -> vector<8x128xf32>
    %c2 = arith.constant 2 : index
    %c0_14 = arith.constant 0 : index
    %30 = vector.load %arg2[%c2, %c0_14] : memref<8x128xf32, #tpu.memory_space<vmem>>, vector<1x128xf32>
    %c3 = arith.constant 3 : index
    %c0_15 = arith.constant 0 : index
    %31 = vector.load %arg2[%c3, %c0_15] : memref<8x128xf32, #tpu.memory_space<vmem>>, vector<1x128xf32>
    %cst_16 = arith.constant dense<0.000000e+00> : vector<128xf32>
    %32 = vector.multi_reduction <add>, %29, %cst_16 [0] : vector<8x128xf32> to vector<128xf32>
    %33 = vector.shape_cast %32 : vector<128xf32> to vector<1x128xf32>
    %cst_17 = arith.constant 1.250000e-01 : f32
    %34 = vector.broadcast %cst_17 : f32 to vector<1x128xf32>
    %35 = arith.mulf %33, %34 : vector<1x128xf32>
    %36 = vector.broadcast %35 : vector<1x128xf32> to vector<8x128xf32>
    %37 = arith.subf %29, %36 : vector<8x128xf32>
    %38 = arith.mulf %37, %37 : vector<8x128xf32>
    %cst_18 = arith.constant dense<0.000000e+00> : vector<128xf32>
    %39 = vector.multi_reduction <add>, %38, %cst_18 [0] : vector<8x128xf32> to vector<128xf32>
    %40 = vector.shape_cast %39 : vector<128xf32> to vector<1x128xf32>
    %cst_19 = arith.constant 1.250000e-01 : f32
    %41 = vector.broadcast %cst_19 : f32 to vector<1x128xf32>
    %42 = arith.mulf %40, %41 : vector<1x128xf32>
    %cst_20 = arith.constant 9.99999974E-6 : f32
    %43 = vector.broadcast %cst_20 : f32 to vector<1x128xf32>
    %44 = arith.addf %42, %43 : vector<1x128xf32>
    %45 = math.rsqrt %44 : vector<1x128xf32>
    %46 = arith.mulf %30, %45 : vector<1x128xf32>
    %47 = arith.mulf %35, %46 : vector<1x128xf32>
    %48 = arith.subf %31, %47 : vector<1x128xf32>
    %49 = vector.broadcast %46 : vector<1x128xf32> to vector<8x128xf32>
    %50 = arith.mulf %29, %49 : vector<8x128xf32>
    %51 = vector.broadcast %48 : vector<1x128xf32> to vector<8x128xf32>
    %52 = arith.addf %50, %51 : vector<8x128xf32>
    %cst_21 = arith.constant 0.000000e+00 : f32
    %53 = vector.broadcast %cst_21 : f32 to vector<8x128xf32>
    %54 = arith.maximumf %52, %53 : vector<8x128xf32>
    %c144 = arith.constant 144 : index
    %c0_22 = arith.constant 0 : index
    %55 = vector.load %arg1[%c144, %c0_22] : memref<272x128xf32, #tpu.memory_space<vmem>>, vector<128x128xf32>
    %cst_23 = arith.constant dense<0.000000e+00> : vector<8x128xf32>
    %56 = tpu.matmul %54, %55, %cst_23 {dimension_numbers = #tpu.dot_dimension_numbers<[1], [0], [0], [1], [0, 0, 1, 1], [], []>} : vector<8x128xf32>, vector<128x128xf32>, vector<8x128xf32> -> vector<8x128xf32>
    %c4 = arith.constant 4 : index
    %c0_24 = arith.constant 0 : index
    %57 = vector.load %arg2[%c4, %c0_24] : memref<8x128xf32, #tpu.memory_space<vmem>>, vector<1x128xf32>
    %58 = vector.broadcast %57 : vector<1x128xf32> to vector<8x128xf32>
    %59 = arith.addf %56, %58 : vector<8x128xf32>
    %c0_25 = arith.constant 0 : index
    %c0_26 = arith.constant 0 : index
    %60 = vector.load %arg3[%c0_25, %c0_26] : memref<8x128xf32, #tpu.memory_space<vmem>>, vector<8x128xf32>
    tpu.vector_store %arg3[%c0_25, %c0_26], %59 {strides = array<i32>} : memref<8x128xf32, #tpu.memory_space<vmem>>, vector<8x128xf32>,
    return
  }
}

</mosaic_0001>

<llo_original>
// kernel: tpu_custom_call.1
$region0: #{tpu_custom_call.1}
  #allocation0 [shape = 'u32[]', space=smem, size = 0x4, offset = 0x4, fixed_abs, tag = 'smem constant byte address 0x4 - core index']
  #allocation1 [shape = 'u32[144,128]{1,0:T(1,128)}', space=vmem, size = 0x12000, scoped, tag = 'internal scratch']
  %s0 = inlined_call_operand.hbm [shape: f32[8,16], index: 0, kind: input, shape index: {}]
  %s1 = inlined_call_operand.hbm [shape: f32[272,128], index: 1, kind: input, shape index: {}]
  %s2 = inlined_call_operand.hbm [shape: f32[8,128], index: 2, kind: input, shape index: {}]
  %s3 = inlined_call_operand.hbm [shape: f32[8,128], index: 3, kind: output, shape index: {}]
  %s4 = sld [smem:[#allocation0]]
  $region34: #{tpu_custom_call.1} parent=0
    _
  %s6 = ssub.s32 1, %s4
  %s7 = scalar_select 0, %s6, %s4
  $region1: #{tpu_custom_call.1} parent=0
    #allocation2 [shape = 'u8[4096]{0}', space=vmem, size = 0x1000, scoped, tag = 'input window, operand 0, single buffered']
    #allocation3 [shape = 's32[1]{0}', space=sflag, size = 0x4, scoped, tag = 'scoped memory for tpu_custom_call.1']
    #allocation4 [shape = 's32[1]{0}', space=sflag, size = 0x4, scoped, tag = 'scoped memory for tpu_custom_call.1']
    #allocation5 [shape = 'u8[139264]{0}', space=vmem, size = 0x22000, scoped, tag = 'input window, operand 1, single buffered']
    #allocation6 [shape = 's32[1]{0}', space=sflag, size = 0x4, scoped, tag = 'scoped memory for tpu_custom_call.1']
    #allocation7 [shape = 'u8[4096]{0}', space=vmem, size = 0x1000, scoped, tag = 'input window, operand 2, single buffered']
    #allocation8 [shape = 'u8[4096]{0}', space=vmem, size = 0x1000, scoped, tag = 'output window, operand 0, single buffered']
    %8 = vsyncpa [#allocation3], 0
    %9 = vsyncpa [#allocation6], 0
    %10 = vsyncpa [#allocation4], 0
    // Predicated region
    $region2: #{tpu_custom_call.1} parent=1 // pred_check
      _
    $region3: #{tpu_custom_call.1} parent=1 // pred_check_branch
      %12 = sbr.rel (0) target = $region5
    $region4: #{tpu_custom_call.1} parent=1 // pred_region
      %s14 = ssub.s32 128, 128
      %15 = vsyncadd [#allocation3], %s14
      %s17 = sshll.u32 [#allocation2], 4
      %s18 = int_to_ptr.vmem [resolvable:$true] %s17
      %20 = dma.hbm_to_vmem [thread:$0]  %s0, 128, %s18, [#allocation3]
    $region5: #{tpu_custom_call.1} parent=1 // pred_fallthru
      _
    // Predicated region
    $region6: #{tpu_custom_call.1} parent=1 // pred_check
      _
    $region7: #{tpu_custom_call.1} parent=1 // pred_check_branch
      %22 = sbr.rel (0) target = $region9
    $region8: #{tpu_custom_call.1} parent=1 // pred_region
      %s24 = ssub.s32 4352, 4352
      %25 = vsyncadd [#allocation6], %s24
      %s26 = sshll.u32 [#allocation5], 4
      %s27 = int_to_ptr.vmem [resolvable:$true] %s26
      %32 = dma.hbm_to_vmem [thread:$0]  %s1, 4352, %s27, [#allocation6], 128, 128, 8
    $region9: #{tpu_custom_call.1} parent=1 // pred_fallthru
      _
    // Predicated region
    $region10: #{tpu_custom_call.1} parent=1 // pred_check
      _
    $region11: #{tpu_custom_call.1} parent=1 // pred_check_branch
      %34 = sbr.rel (0) target = $region13
    $region12: #{tpu_custom_call.1} parent=1 // pred_region
      %s36 = ssub.s32 128, 128
      %37 = vsyncadd [#allocation6], %s36
      %s39 = sshll.u32 [#allocation7], 4
      %s40 = int_to_ptr.vmem [resolvable:$true] %s39
      %42 = dma.hbm_to_vmem [thread:$0]  %s2, 128, %s40, [#allocation6]
    $region13: #{tpu_custom_call.1} parent=1 // pred_fallthru
      _
    // Predicated region
    $region14: #{tpu_custom_call.1} parent=1 // pred_check
      _
    $region15: #{tpu_custom_call.1} parent=1 // pred_check_branch
      %44 = sbr.rel (0) target = $region17
    $region16: #{tpu_custom_call.1} parent=1 // pred_region
      %45 = dma.done [#allocation3], 128
    $region17: #{tpu_custom_call.1} parent=1 // pred_fallthru
      _
    // Predicated region
    $region18: #{tpu_custom_call.1} parent=1 // pred_check
      _
    $region19: #{tpu_custom_call.1} parent=1 // pred_check_branch
      %47 = sbr.rel (0) target = $region21
    $region20: #{tpu_custom_call.1} parent=1 // pred_region
      %48 = dma.done [#allocation6], 4352
    $region21: #{tpu_custom_call.1} parent=1 // pred_fallthru
      _
    // Predicated region
    $region22: #{tpu_custom_call.1} parent=1 // pred_check
      _
    $region23: #{tpu_custom_call.1} parent=1 // pred_check_branch
      %50 = sbr.rel (0) target = $region25
    $region24: #{tpu_custom_call.1} parent=1 // pred_region
      %51 = dma.done [#allocation6], 128
    $region25: #{tpu_custom_call.1} parent=1 // pred_fallthru
      _
    %v52 = vld [vmem:[#allocation2] sm:$0xff]
    %v53 = vld [vmem:[#allocation5] sm:$0xff]
    %v54 = vld [vmem:[#allocation5 + $0x8] sm:$0xff]
    %vm55 = vcmask 130048
    %v57 = vsel %vm55, %v52, 0
    %59 = vmatprep.subr.mxu0 0.0
    %60 = vmatpush1.msra.mxu0 %v53
    %61 = vmatprep.subr.mxu0 0.0
    %62 = vmatpush1.msra.mxu0 %v54
    %63 = vmatprep.subr.mxu0 0.0
    %64 = vmatpush1.msra.mxu0 0.0
    %65 = vmatprep.subr.mxu0 0.0
    %66 = vmatpush1.msra.mxu0 0.0
    %67 = vmatprep.subr.mxu0 0.0
    %68 = vmatpush1.msra.mxu0 0.0
    %69 = vmatprep.subr.mxu0 0.0
    %70 = vmatpush1.msra.mxu0 0.0
    %71 = vmatprep.subr.mxu0 0.0
    %72 = vmatpush1.msra.mxu0 0.0
    %73 = vmatprep.subr.mxu0 0.0
    %74 = vmatpush1.msra.mxu0 0.0
    %75 = vmatprep.subr.mxu0 0.0
    %76 = vmatpush1.msra.mxu0 0.0
    %77 = vmatprep.subr.mxu0 0.0
    %78 = vmatpush1.msra.mxu0 0.0
    %79 = vmatprep.subr.mxu0 0.0
    %80 = vmatpush1.msra.mxu0 0.0
    %81 = vmatprep.subr.mxu0 0.0
    %82 = vmatpush1.msra.mxu0 0.0
    %83 = vmatprep.subr.mxu0 0.0
    %84 = vmatpush1.msra.mxu0 0.0
    %85 = vmatprep.subr.mxu0 0.0
    %86 = vmatpush1.msra.mxu0 0.0
    %87 = vmatprep.subr.mxu0 0.0
    %88 = vmatpush1.msra.mxu0 0.0
    %89 = vmatprep.subr.mxu0 0.0
    %90 = vmatpush1.msra.mxu0 0.0
    %91 = vmatprep.subr.mxu0 0.0
    %92 = vmatpush1.msra.mxu0 0.0
    %93 = vmatprep.subr.mxu0 0.0
    %94 = vmatpush1.msra.mxu0 0.0
    %95 = vmatprep.subr.mxu0 0.0
    %96 = vmatpush1.msra.mxu0 0.0
    %97 = vmatprep.subr.mxu0 0.0
    %98 = vmatpush1.msra.mxu0 0.0
    %99 = vmatprep.subr.mxu0 0.0
    %100 = vmatpush1.msra.mxu0 0.0
    %101 = vmatprep.subr.mxu0 0.0
    %102 = vmatpush1.msra.mxu0 0.0
    %103 = vmatprep.subr.mxu0 0.0
    %104 = vmatpush1.msra.mxu0 0.0
    %105 = vmatprep.subr.mxu0 0.0
    %106 = vmatpush1.msra.mxu0 0.0
    %107 = vmatprep.subr.mxu0 0.0
    %108 = vmatpush1.msra.mxu0 0.0
    %109 = vmatprep.subr.mxu0 0.0
    %110 = vmatpush1.msra.mxu0 0.0
    %111 = vmatprep.subr.mxu0 0.0
    %112 = vmatpush1.msra.mxu0 0.0
    %113 = vmatprep.subr.mxu0 0.0
    %114 = vmatpush1.msra.mxu0 0.0
    %115 = vmatprep.subr.mxu0 0.0
    %116 = vmatpush1.msra.mxu0 0.0
    %117 = vmatprep.subr.mxu0 0.0
    %118 = vmatpush1.msra.mxu0 0.0
    %119 = vmatprep.subr.mxu0 0.0
    %120 = vmatpush1.msra.mxu0 0.0
    %121 = vmatprep.subr.mxu0 0.0
    %122 = vmatpush1.msra.mxu0 0.0
    %123 = vmatprep.mubr.f32.mxu0 0.0
    %124 = vmatmul.mubr.f32.gmra.mrb[0].mxu0 %v57
    %v125 = vpop.f32.mrb[0].mxu0
    %v126 = vadd.f32 0.0, %v125
    %v127 = vpop.f32.mrb[0].mxu0
    %128 = vdwg.mxu0
    %v129 = vld [vmem:[#allocation7] sm:$0x1]
    %v130 = vld [vmem:[#allocation7 + $0x1] sm:$0x1]
    %v131 = vrot.slane %v126, 4
    %v132 = vadd.f32 %v126, %v131
    %v133 = vrot.slane %v132, 2
    %v134 = vadd.f32 %v132, %v133
    %v135 = vrot.slane %v134, 1
    %v136 = vadd.f32 %v134, %v135
    %v137 = vmul.f32 %v136, 0.125
    %v138 = vsub.f32 %v126, %v137
    %v139 = vmul.f32 %v138, %v138
    %v140 = vrot.slane %v139, 4
    %v141 = vadd.f32 %v139, %v140
    %v142 = vrot.slane %v141, 2
    %v143 = vadd.f32 %v141, %v142
    %v144 = vrot.slane %v143, 1
    %v145 = vadd.f32 %v143, %v144
    %v146 = vmul.f32 %v145, 0.125
    %v147 = vadd.f32 %v146, 1e-05
    %v148 = vrsqrt.pop %v147
    %v149 = vmul.f32 %v129, %v148
    %v150 = vmul.f32 %v137, %v149
    %v151 = vsub.f32 %v130, %v150
    %v152 = vlaneseq
    %v153 = vshrl.u32 %v152, 7
    %v154 = vsub.s32 0, %v153
    %v155 = vrot.slane %v149, %v154
    %v156 = vmul.f32 %v126, %v155
    %v157 = vlaneseq
    %v158 = vshrl.u32 %v157, 7
    %v159 = vsub.s32 0, %v158
    %v160 = vrot.slane %v151, %v159
    %v161 = vadd.f32 %v156, %v160
    %v162 = vmax.f32 %v161, 0.0
    %v163 = vld [vmem:[#allocation5 + $0x10] sm:$0xff]
    %v164 = vld [vmem:[#allocation5 + $0x18] sm:$0xff]
    %v165 = vld [vmem:[#allocation5 + $0x20] sm:$0xff]
    %v166 = vld [vmem:[#allocation5 + $0x28] sm:$0xff]
    %v167 = vld [vmem:[#allocation5 + $0x30] sm:$0xff]
    %v168 = vld [vmem:[#allocation5 + $0x38] sm:$0xff]
    %v169 = vld [vmem:[#allocation5 + $0x40] sm:$0xff]
    %v170 = vld [vmem:[#allocation5 + $0x48] sm:$0xff]
    %v171 = vld [vmem:[#allocation5 + $0x50] sm:$0xff]
    %v172 = vld [vmem:[#allocation5 + $0x58] sm:$0xff]
    %v173 = vld [vmem:[#allocation5 + $0x60] sm:$0xff]
    %v174 = vld [vmem:[#allocation5 + $0x68] sm:$0xff]
    %v175 = vld [vmem:[#allocation5 + $0x70] sm:$0xff]
    %v176 = vld [vmem:[#allocation5 + $0x78] sm:$0xff]
    %v177 = vld [vmem:[#allocation5 + $0x80] sm:$0xff]
    %v178 = vld [vmem:[#allocation5 + $0x88] sm:$0xff]
    %179 = vmatprep.subr.mxu0 0.0
    %180 = vmatpush1.msra.mxu0 %v163
    %181 = vmatprep.subr.mxu0 0.0
    %182 = vmatpush1.msra.mxu0 %v164
    %183 = vmatprep.subr.mxu0 0.0
    %184 = vmatpush1.msra.mxu0 %v165
    %185 = vmatprep.subr.mxu0 0.0
    %186 = vmatpush1.msra.mxu0 %v166
    %187 = vmatprep.subr.mxu0 0.0
    %188 = vmatpush1.msra.mxu0 %v167
    %189 = vmatprep.subr.mxu0 0.0
    %190 = vmatpush1.msra.mxu0 %v168
    %191 = vmatprep.subr.mxu0 0.0
    %192 = vmatpush1.msra.mxu0 %v169
    %193 = vmatprep.subr.mxu0 0.0
    %194 = vmatpush1.msra.mxu0 %v170
    %195 = vmatprep.subr.mxu0 0.0
    %196 = vmatpush1.msra.mxu0 %v171
    %197 = vmatprep.subr.mxu0 0.0
    %198 = vmatpush1.msra.mxu0 %v172
    %199 = vmatprep.subr.mxu0 0.0
    %200 = vmatpush1.msra.mxu0 %v173
    %201 = vmatprep.subr.mxu0 0.0
    %202 = vmatpush1.msra.mxu0 %v174
    %203 = vmatprep.subr.mxu0 0.0
    %204 = vmatpush1.msra.mxu0 %v175
    %205 = vmatprep.subr.mxu0 0.0
    %206 = vmatpush1.msra.mxu0 %v176
    %207 = vmatprep.subr.mxu0 0.0
    %208 = vmatpush1.msra.mxu0 %v177
    %209 = vmatprep.subr.mxu0 0.0
    %210 = vmatpush1.msra.mxu0 %v178
    %211 = vmatprep.subr.mxu0 0.0
    %212 = vmatpush1.msra.mxu0 0.0
    %213 = vmatprep.subr.mxu0 0.0
    %214 = vmatpush1.msra.mxu0 0.0
    %215 = vmatprep.subr.mxu0 0.0
    %216 = vmatpush1.msra.mxu0 0.0
    %217 = vmatprep.subr.mxu0 0.0
    %218 = vmatpush1.msra.mxu0 0.0
    %219 = vmatprep.subr.mxu0 0.0
    %220 = vmatpush1.msra.mxu0 0.0
    %221 = vmatprep.subr.mxu0 0.0
    %222 = vmatpush1.msra.mxu0 0.0
    %223 = vmatprep.subr.mxu0 0.0
    %224 = vmatpush1.msra.mxu0 0.0
    %225 = vmatprep.subr.mxu0 0.0
    %226 = vmatpush1.msra.mxu0 0.0
    %227 = vmatprep.subr.mxu0 0.0
    %228 = vmatpush1.msra.mxu0 0.0
    %229 = vmatprep.subr.mxu0 0.0
    %230 = vmatpush1.msra.mxu0 0.0
    %231 = vmatprep.subr.mxu0 0.0
    %232 = vmatpush1.msra.mxu0 0.0
    %233 = vmatprep.subr.mxu0 0.0
    %234 = vmatpush1.msra.mxu0 0.0
    %235 = vmatprep.subr.mxu0 0.0
    %236 = vmatpush1.msra.mxu0 0.0
    %237 = vmatprep.subr.mxu0 0.0
    %238 = vmatpush1.msra.mxu0 0.0
    %239 = vmatprep.subr.mxu0 0.0
    %240 = vmatpush1.msra.mxu0 0.0
    %241 = vmatprep.subr.mxu0 0.0
    %242 = vmatpush1.msra.mxu0 0.0
    %243 = vmatprep.mubr.f32.mxu0 0.0
    %244 = vmatmul.mubr.f32.gmra.mrb[0].mxu0 %v162
    %v245 = vpop.f32.mrb[0].mxu0
    %v246 = vadd.f32 0.0, %v245
    %v247 = vpop.f32.mrb[0].mxu0
    %248 = vdwg.mxu0
    %v249 = vld [vmem:[#allocation7 + $0x2] sm:$0x1]
    %v250 = vld [vmem:[#allocation7 + $0x3] sm:$0x1]
    %v251 = vrot.slane %v246, 4
    %v252 = vadd.f32 %v246, %v251
    %v253 = vrot.slane %v252, 2
    %v254 = vadd.f32 %v252, %v253
    %v255 = vrot.slane %v254, 1
    %v256 = vadd.f32 %v254, %v255
    %v257 = vmul.f32 %v256, 0.125
    %v258 = vsub.f32 %v246, %v257
    %v259 = vmul.f32 %v258, %v258
    %v260 = vrot.slane %v259, 4
    %v261 = vadd.f32 %v259, %v260
    %v262 = vrot.slane %v261, 2
    %v263 = vadd.f32 %v261, %v262
    %v264 = vrot.slane %v263, 1
    %v265 = vadd.f32 %v263, %v264
    %v266 = vmul.f32 %v265, 0.125
    %v267 = vadd.f32 %v266, 1e-05
    %v268 = vrsqrt.pop %v267
    %v269 = vmul.f32 %v249, %v268
    %v270 = vmul.f32 %v257, %v269
    %v271 = vsub.f32 %v250, %v270
    %v272 = vlaneseq
    %v273 = vshrl.u32 %v272, 7
    %v274 = vsub.s32 0, %v273
    %v275 = vrot.slane %v269, %v274
    %v276 = vmul.f32 %v246, %v275
    %v277 = vlaneseq
    %v278 = vshrl.u32 %v277, 7
    %v279 = vsub.s32 0, %v278
    %v280 = vrot.slane %v271, %v279
    %v281 = vadd.f32 %v276, %v280
    %v282 = vmax.f32 %v281, 0.0
    %v283 = vld [vmem:[#allocation5 + $0x90] sm:$0xff]
    %v284 = vld [vmem:[#allocation5 + $0x98] sm:$0xff]
    %v285 = vld [vmem:[#allocation5 + $0xa0] sm:$0xff]
    %v286 = vld [vmem:[#allocation5 + $0xa8] sm:$0xff]
    %v287 = vld [vmem:[#allocation5 + $0xb0] sm:$0xff]
    %v288 = vld [vmem:[#allocation5 + $0xb8] sm:$0xff]
    %v289 = vld [vmem:[#allocation5 + $0xc0] sm:$0xff]
    %v290 = vld [vmem:[#allocation5 + $0xc8] sm:$0xff]
    %v291 = vld [vmem:[#allocation5 + $0xd0] sm:$0xff]
    %v292 = vld [vmem:[#allocation5 + $0xd8] sm:$0xff]
    %v293 = vld [vmem:[#allocation5 + $0xe0] sm:$0xff]
    %v294 = vld [vmem:[#allocation5 + $0xe8] sm:$0xff]
    %v295 = vld [vmem:[#allocation5 + $0xf0] sm:$0xff]
    %v296 = vld [vmem:[#allocation5 + $0xf8] sm:$0xff]
    %v297 = vld [vmem:[#allocation5 + $0x100] sm:$0xff]
    %v298 = vld [vmem:[#allocation5 + $0x108] sm:$0xff]
    %v299 = vld [vmem:[#allocation7 + $0x4] sm:$0x1]
    %v300 = vlaneseq
    %v301 = vshrl.u32 %v300, 7
    %v302 = vsub.s32 0, %v301
    %v303 = vrot.slane %v299, %v302
    %304 = vmatprep.subr.mxu0 0.0
    %305 = vmatpush1.msra.mxu0 %v283
    %306 = vmatprep.subr.mxu0 0.0
    %307 = vmatpush1.msra.mxu0 %v284
    %308 = vmatprep.subr.mxu0 0.0
    %309 = vmatpush1.msra.mxu0 %v285
    %310 = vmatprep.subr.mxu0 0.0
    %311 = vmatpush1.msra.mxu0 %v286
    %312 = vmatprep.subr.mxu0 0.0
    %313 = vmatpush1.msra.mxu0 %v287
    %314 = vmatprep.subr.mxu0 0.0
    %315 = vmatpush1.msra.mxu0 %v288
    %316 = vmatprep.subr.mxu0 0.0
    %317 = vmatpush1.msra.mxu0 %v289
    %318 = vmatprep.subr.mxu0 0.0
    %319 = vmatpush1.msra.mxu0 %v290
    %320 = vmatprep.subr.mxu0 0.0
    %321 = vmatpush1.msra.mxu0 %v291
    %322 = vmatprep.subr.mxu0 0.0
    %323 = vmatpush1.msra.mxu0 %v292
    %324 = vmatprep.subr.mxu0 0.0
    %325 = vmatpush1.msra.mxu0 %v293
    %326 = vmatprep.subr.mxu0 0.0
    %327 = vmatpush1.msra.mxu0 %v294
    %328 = vmatprep.subr.mxu0 0.0
    %329 = vmatpush1.msra.mxu0 %v295
    %330 = vmatprep.subr.mxu0 0.0
    %331 = vmatpush1.msra.mxu0 %v296
    %332 = vmatprep.subr.mxu0 0.0
    %333 = vmatpush1.msra.mxu0 %v297
    %334 = vmatprep.subr.mxu0 0.0
    %335 = vmatpush1.msra.mxu0 %v298
    %336 = vmatprep.subr.mxu0 0.0
    %337 = vmatpush1.msra.mxu0 0.0
    %338 = vmatprep.subr.mxu0 0.0
    %339 = vmatpush1.msra.mxu0 0.0
    %340 = vmatprep.subr.mxu0 0.0
    %341 = vmatpush1.msra.mxu0 0.0
    %342 = vmatprep.subr.mxu0 0.0
    %343 = vmatpush1.msra.mxu0 0.0
    %344 = vmatprep.subr.mxu0 0.0
    %345 = vmatpush1.msra.mxu0 0.0
    %346 = vmatprep.subr.mxu0 0.0
    %347 = vmatpush1.msra.mxu0 0.0
    %348 = vmatprep.subr.mxu0 0.0
    %349 = vmatpush1.msra.mxu0 0.0
    %350 = vmatprep.subr.mxu0 0.0
    %351 = vmatpush1.msra.mxu0 0.0
    %352 = vmatprep.subr.mxu0 0.0
    %353 = vmatpush1.msra.mxu0 0.0
    %354 = vmatprep.subr.mxu0 0.0
    %355 = vmatpush1.msra.mxu0 0.0
    %356 = vmatprep.subr.mxu0 0.0
    %357 = vmatpush1.msra.mxu0 0.0
    %358 = vmatprep.subr.mxu0 0.0
    %359 = vmatpush1.msra.mxu0 0.0
    %360 = vmatprep.subr.mxu0 0.0
    %361 = vmatpush1.msra.mxu0 0.0
    %362 = vmatprep.subr.mxu0 0.0
    %363 = vmatpush1.msra.mxu0 0.0
    %364 = vmatprep.subr.mxu0 0.0
    %365 = vmatpush1.msra.mxu0 0.0
    %366 = vmatprep.subr.mxu0 0.0
    %367 = vmatpush1.msra.mxu0 0.0
    %368 = vmatprep.mubr.f32.mxu0 0.0
    %369 = vmatmul.mubr.f32.gmra.mrb[0].mxu0 %v282
    %v370 = vpop.f32.mrb[0].mxu0
    %v371 = vadd.f32 %v303, %v370
    %v372 = vpop.f32.mrb[0].mxu0
    %373 = vdwg.mxu0
    %374 = vst [vmem:[#allocation8] sm:$0xff] %v371
    // Predicated region
    $region26: #{tpu_custom_call.1} parent=1 // pred_check
      _
    $region27: #{tpu_custom_call.1} parent=1 // pred_check_branch
      %376 = sbr.rel (0) target = $region29
    $region28: #{tpu_custom_call.1} parent=1 // pred_region
      %s378 = ssub.s32 128, 128
      %379 = vsyncadd [#allocation4], %s378
      %s381 = sshll.u32 [#allocation8], 4
      %s382 = int_to_ptr.vmem [resolvable:$true] %s381
      %384 = dma.vmem_to_hbm [thread:$0]  %s382, 128, %s3, [#allocation4]
    $region29: #{tpu_custom_call.1} parent=1 // pred_fallthru
      _
    // Predicated region
    $region30: #{tpu_custom_call.1} parent=1 // pred_check
      _
    $region31: #{tpu_custom_call.1} parent=1 // pred_check_branch
      %386 = sbr.rel (0) target = $region33
    $region32: #{tpu_custom_call.1} parent=1 // pred_region
      %387 = dma.done [#allocation4], 128
    $region33: #{tpu_custom_call.1} parent=1 // pred_fallthru
      _
    %388 = vsyncpa [#allocation3], 1
    %389 = vsyncpa [#allocation6], 1
    %390 = vsyncpa [#allocation4], 1

</llo_original>
